<compile_context>
chip_gen: v6e
topology: v6e:2x2x1
jax: 0.10.0
libtpu: 0.0.40
codegen_flags: <defaults>
</compile_context>

<pallas_src>
import functools

import jax
import jax.numpy as jnp
from jax.experimental import pallas as pl
from jax.experimental.pallas import tpu as pltpu


def _round_up(x: int, m: int) -> int:
    return ((x + m - 1) // m) * m


def linear_kernel(x_ref, w_ref, b_ref, o_ref, *, chunk, num_chunks):
    # x_ref: (TM, C)   native-dtype VMEM tile of the (packed) batch
    # w_ref: (R, C)    native-dtype VMEM weight (block-diagonal when packed)
    # b_ref: (1, 1)    f32 SMEM scalar bias
    # o_ref: (R, TM)   f32 VMEM lane-dense output slab for this tile
    w = w_ref[...]
    b = b_ref[0, 0]

    def do_chunk(off):
        xc = x_ref[pl.ds(off, chunk), :]                       # (chunk, C)
        # Contract feature axis of both operands: (R, C) x (chunk, C) -> (R, chunk).
        y = jax.lax.dot_general(
            w, xc,
            dimension_numbers=(((1,), (1,)), ((), ())),
            preferred_element_type=jnp.float32,
        )
        o_ref[:, pl.ds(off, chunk)] = (y + b).astype(o_ref.dtype)

    if num_chunks == 1:
        do_chunk(0)
    else:
        # Chunk the TM axis so the MXU-result -> bias-add -> store chain stays
        # short-lived (bounds vreg pressure for multi-thousand-lane tiles).
        def body(c, carry):
            do_chunk(pl.multiple_of(c * chunk, chunk))
            return carry

        jax.lax.fori_loop(0, num_chunks, body, 0, unroll=True)


def my_nn_forward(x, weight, bias, *,
                  target_step_bytes=4 * 1024 * 1024,
                  pallas_min_bytes=1 * 1024 * 1024):
    """Forward of nn.Linear(F, 1): y = x @ weight.T + bias.

    x: (B, F), weight: (1, F) (PyTorch layout), bias: (1,). Returns (B, 1) f32.
    """
    B, F = x.shape
    itemsize = jnp.dtype(x.dtype).itemsize

    # Tiny problems: custom-call + per-grid-step overhead dominates any HBM
    # streaming win — use plain XLA (or fuse this linear into a neighbor).
    if B * F * itemsize < pallas_min_bytes:
        return (x.astype(jnp.float32) @ weight.reshape(F, 1).astype(jnp.float32)
                + bias.astype(jnp.float32).reshape(1, 1))

    # --- lane-pack a narrow feature dim into full 128-lane rows -------------
    k = 128 // F if (F < 128 and 128 % F == 0) else 1
    if k > 1 and B % k == 0:
        C = k * F
        xk = x.reshape(B // k, C)                 # contiguous -> free reshape
        w_vec = weight.reshape(F).astype(x.dtype)
        # Block-diagonal (k, k*F): row i holds w at columns [i*F, (i+1)*F).
        w_mat = (jnp.eye(k, dtype=x.dtype)[:, :, None] * w_vec[None, None, :]).reshape(k, C)
        R = k
    else:
        k = 1
        C = F
        xk = x
        w_mat = weight.reshape(1, F).astype(x.dtype)
        R = 1
    Bp = xk.shape[0]

    # --- batch tile size -----------------------------------------------------
    c_pad = _round_up(C, 128)                     # lane-padded row width in VMEM
    # Rows per grid step to hit ~target_step_bytes of x traffic per step.
    tm = max(128, (target_step_bytes // (c_pad * itemsize)) // 128 * 128)
    # Keep >= 2 tiles when the batch permits so the "parallel" axis feeds both
    # v7x TensorCores (no-op on single-TC v5e/v6e).
    tm = min(tm, max(128, _round_up(-(-Bp // 2), 128)))
    # Hard cap so the double-buffered tile stays well inside scoped VMEM.
    max_tile_bytes = 12 * 1024 * 1024
    tm = min(tm, max(128, (max_tile_bytes // (c_pad * itemsize)) // 128 * 128))
    num_tiles = pl.cdiv(Bp, tm)                   # ragged last tile, no HBM pad copy

    # In-kernel chunk along the TM/lane axis (largest power-of-two divisor <= 1024).
    chunk = 1024
    while tm % chunk:
        chunk //= 2
    num_chunks = tm // chunk

    # VMEM: 2 x-buffers + 2 out-buffers + weight + slack.
    tile_bytes = tm * c_pad * itemsize
    vmem_limit = 2 * tile_bytes + 2 * R * tm * 4 + R * c_pad * itemsize + (1 << 20)
    vmem_limit = int(min(max(vmem_limit, 4 << 20), 32 << 20))

    b_smem = jnp.reshape(bias, (1, 1)).astype(jnp.float32)

    # TODO(synk): if F ever grows so a single (tm, F) tile can't fit VMEM, add a
    # trailing "arbitrary" feature grid axis with a VMEM f32 accumulator and
    # pl.when(k==0)/pl.when(k==last) init/finalize.
    out = pl.pallas_call(
        functools.partial(linear_kernel, chunk=chunk, num_chunks=num_chunks),
        out_shape=jax.ShapeDtypeStruct((R, Bp), jnp.float32),
        grid=(num_tiles,),
        in_specs=[
            pl.BlockSpec((tm, C), lambda i: (i, 0)),   # x: stream TM packed rows/step
            pl.BlockSpec((R, C), lambda i: (0, 0)),    # weight: resident full block
            pl.BlockSpec(memory_space=pltpu.SMEM),     # bias scalar
        ],
        out_specs=pl.BlockSpec((R, tm), lambda i: (0, i)),  # lane-dense output slab
        compiler_params=pltpu.CompilerParams(
            dimension_semantics=("parallel",),         # batch tiles across TCs (v7x)
            vmem_limit_bytes=vmem_limit,
        ),
    )(xk, w_mat, b_smem)

    # (R, Bp) -> (B, 1): out[i, j] is the result for original row j*k + i.
    return out.T.reshape(Bp * R, 1)[:B]


if __name__ == "__main__":
    input_features = 32
    batch = 1000   # packed path (k=4, Bp=250), 2 grid tiles with a ragged tail

    key = jax.random.PRNGKey(0)
    kx, kw, kb = jax.random.split(key, 3)

    # Deterministic init matching PyTorch nn.Linear's uniform bound.
    bound = 1.0 / (input_features ** 0.5)
    weight = jax.random.uniform(kw, (1, input_features), jnp.float32, -bound, bound)
    bias = jax.random.uniform(kb, (1,), jnp.float32, -bound, bound)
    x = jax.random.normal(kx, (batch, input_features), jnp.float32)

    # pallas_min_bytes=0 forces the Pallas path at this demo size (production
    # callers keep the default gate and fall back to plain XLA for tiny inputs).
    out = my_nn_forward(x, weight, bias, pallas_min_bytes=0)
    jax.block_until_ready(out)

    ref = x @ weight.T + bias
    assert out.shape == (batch, 1)
    assert jnp.allclose(out, ref, atol=1e-4, rtol=1e-4), "mismatch vs reference"
    print("KERNEL_OK")
</pallas_src>

<mosaic_0001>
module attributes {stable_mosaic.version = 11 : i64} {
  func.func @linear_kernel(%arg0: i32, %arg1: memref<128x128xf32, #tpu.memory_space<vmem>>, %arg2: memref<4x128xf32, #tpu.memory_space<vmem>>, %arg3: memref<1x1xf32, #tpu.memory_space<smem>>, %arg4: memref<4x128xf32, #tpu.memory_space<vmem>>) attributes {dimension_semantics = [#tpu.dimension_semantics<parallel>], iteration_bounds = array<i64: 2>, scalar_prefetch = 0 : i64, scratch_operands = 0 : i64, tpu.core_type = #tpu.core_type<tc>, window_params = [{transform_indices = @transform_0, window_bounds = array<i64: 128, 128>}, {pipeline_mode = #tpu.pipeline_mode<synchronous>, transform_indices = @transform_1, window_bounds = array<i64: 4, 128>}, {transform_indices = @transform_2, window_bounds = array<i64: 1, 1>}, {transform_indices = @transform_3, window_bounds = array<i64: 4, 128>}]} {
    %c0 = arith.constant 0 : index
    %c0_0 = arith.constant 0 : index
    %0 = vector.load %arg2[%c0, %c0_0] : memref<4x128xf32, #tpu.memory_space<vmem>>, vector<4x128xf32>
    %c0_1 = arith.constant 0 : index
    %c0_2 = arith.constant 0 : index
    %1 = memref.load %arg3[%c0_1, %c0_2] : memref<1x1xf32, #tpu.memory_space<smem>>
    %c0_3 = arith.constant 0 : index
    %c0_4 = arith.constant 0 : index
    %2 = vector.load %arg1[%c0_3, %c0_4] : memref<128x128xf32, #tpu.memory_space<vmem>>, vector<128x128xf32>
    %cst = arith.constant dense<0.000000e+00> : vector<4x128xf32>
    %3 = tpu.matmul %0, %2, %cst {dimension_numbers = #tpu.dot_dimension_numbers<[1], [1], [0], [0], [0, 0, 1, 0], [], []>} : vector<4x128xf32>, vector<128x128xf32>, vector<4x128xf32> -> vector<4x128xf32>
    %4 = vector.broadcast %1 : f32 to vector<4x128xf32>
    %5 = arith.addf %3, %4 : vector<4x128xf32>
    %c0_5 = arith.constant 0 : index
    %c0_6 = arith.constant 0 : index
    %6 = vector.load %arg4[%c0_5, %c0_6] : memref<4x128xf32, #tpu.memory_space<vmem>>, vector<4x128xf32>
    tpu.vector_store %arg4[%c0_5, %c0_6], %5 {strides = array<i32>} : memref<4x128xf32, #tpu.memory_space<vmem>>, vector<4x128xf32>,
    return
  }
  func.func @transform_0(%arg0: i32) -> (i32, i32) {
    %c0_i32 = arith.constant 0 : i32
    %c0_i32_0 = arith.constant 0 : i32
    return %arg0, %c0_i32 : i32, i32
  }
  func.func @transform_1(%arg0: i32) -> (i32, i32) {
    %c0_i32 = arith.constant 0 : i32
    %c0_i32_0 = arith.constant 0 : i32
    %c0_i32_1 = arith.constant 0 : i32
    return %c0_i32, %c0_i32_0 : i32, i32
  }
  func.func @transform_2(%arg0: i32) -> (i32, i32) {
    %c0_i32 = arith.constant 0 : i32
    %c0_i32_0 = arith.constant 0 : i32
    %c0_i32_1 = arith.constant 0 : i32
    return %c0_i32, %c0_i32_0 : i32, i32
  }
  func.func @transform_3(%arg0: i32) -> (i32, i32) {
    %c0_i32 = arith.constant 0 : i32
    %c0_i32_0 = arith.constant 0 : i32
    return %c0_i32, %arg0 : i32, i32
  }
}

</mosaic_0001>

<llo_original>
// kernel: tpu_custom_call.1
$region0: #{tpu_custom_call.1}
  #allocation0 [shape = 'u32[]', space=smem, size = 0x4, offset = 0x4, fixed_abs, tag = 'smem constant byte address 0x4 - core index']
  #allocation1 [shape = 'u32[144,128]{1,0:T(1,128)}', space=vmem, size = 0x12000, scoped, tag = 'internal scratch']
  #allocation2 [shape = 'f32[1,1]{1,0:T(1,128)S(6)}', space=smem, size = 0x200, scoped, tag = 'scoped memory for tpu_custom_call.1']
  %s0 = inlined_call_operand.hbm [shape: f32[250,128], index: 0, kind: input, shape index: {}]
  %s1 = inlined_call_operand.hbm [shape: f32[4,128], index: 1, kind: input, shape index: {}]
  %s2 = inlined_call_operand.<no memory space> [shape: f32[1,1], index: 2, kind: input, shape index: {}]
  %s3 = inlined_call_operand.hbm [shape: f32[4,250], index: 3, kind: output, shape index: {}]
  %s4 = sld [smem:[#allocation0]]
  $region53: #{tpu_custom_call.1} parent=0
    _
  %s6 = ssub.s32 1, %s4
  %s7 = scalar_select 0, %s6, %s4
  %8 = sst [smem:[#allocation2]] %s2
  $region1: #{tpu_custom_call.1} parent=0
    #allocation3 [shape = 'u8[131072]{0}', space=vmem, size = 0x20000, scoped, tag = 'input window, operand 0']
    #allocation4 [shape = 's32[2]{0}', space=sflag, size = 0x8, scoped, tag = 'scoped memory for tpu_custom_call.1']
    #allocation5 [shape = 's32[2]{0}', space=sflag, size = 0x8, scoped, tag = 'scoped memory for tpu_custom_call.1']
    #allocation6 [shape = 'u8[2048]{0}', space=vmem, size = 0x800, scoped, tag = 'input window, operand 1, single buffered']
    #allocation7 [shape = 's32[1]{0}', space=sflag, size = 0x4, scoped, tag = 'scoped memory for tpu_custom_call.1']
    #allocation8 [shape = 'u8[4096]{0}', space=vmem, size = 0x1000, scoped, tag = 'output window, operand 0']
    %9 = vsyncpa [#allocation4], 0
    %s10 = scalar_lea.sflag [#allocation4], 1
    %11 = vsyncpa %s10, 0
    %12 = vsyncpa [#allocation7], 0
    %13 = vsyncpa [#allocation5], 0
    %s14 = scalar_lea.sflag [#allocation5], 1
    %15 = vsyncpa %s14, 0
    loop: start=0, step=1, limit=4
    $region2: #{tpu_custom_call.1} parent=1 // loop_pre_header
      _
    $region3: #{tpu_custom_call.1} parent=1 // loop_header
      %s17 = sphi 0, %s21
      %p18 = scmp.ge.s32.totalorder %s17, 4
      %s27 = sphi 0, %s29
      %s30 = sphi 0, %s27
      %s31 = sphi 0, %s30
      %s47 = sphi 0, %s31
      %s51 = sphi 0, %s51
      %s53 = sphi 0, %s51
      %s54 = sphi 0, %s53
      %s68 = sphi 0, %s54
      %s72 = sphi 0, %s72
      %s74 = sphi 0, %s72
      %s75 = sphi 0, %s74
      %s89 = sphi 0, %s75
      %s95 = sphi 0, %s97
      %s98 = sphi 0, %s95
      %s99 = sphi 0, %s98
      %s115 = sphi 0, %s99
    $region4: #{tpu_custom_call.1} parent=1 // loop_header_branch
      %20 = sbr.rel (%p18) target = $region8
    $region5: #{tpu_custom_call.1} parent=1 // loop_body
      %s22 = ssub.s32 %s17, 1
      %s23 = ssub.s32 %s17, 2
      %s24 = sadd.s32 %s17, 1
      %s25 = ssub.s32 %s17, %s24
      %p26 = scmp.eq.s32.totalorder %s25, 0
      %s28 = sadd.s32 %s27, 1
      %s29 = scalar_select %p26, %s27, %s28
      %p32 = pneg %p26
      %p33 = scmp.eq.s32.totalorder %s17, 1
      %p34 = por %p32, %p33
      %p35 = scmp.ne.s32.totalorder %s27, %s30
      %p36 = scmp.eq.s32.totalorder %s17, 0
      %p37 = por %p35, %p36
      %p38 = scmp.ne.s32.totalorder %s27, %s30
      %p39 = scmp.eq.s32.totalorder %s22, 1
      %p40 = por %p38, %p39
      %p41 = scmp.ne.s32.totalorder %s30, %s31
      %p42 = scmp.eq.s32.totalorder %s22, 0
      %p43 = por %p41, %p42
      %p44 = scmp.ne.s32.totalorder %s30, %s31
      %p45 = scmp.eq.s32.totalorder %s23, 1
      %p46 = por %p44, %p45
      %p48 = scmp.ne.s32.totalorder %s31, %s47
      %p49 = scmp.eq.s32.totalorder %s23, 0
      %p50 = por %p48, %p49
      %s52 = sadd.s32 %s51, 1
      %p55 = scmp.eq.s32.totalorder %s17, 1
      %p56 = scmp.ne.s32.totalorder %s51, %s53
      %p57 = scmp.eq.s32.totalorder %s17, 0
      %p58 = por %p56, %p57
      %p59 = scmp.ne.s32.totalorder %s51, %s53
      %p60 = scmp.eq.s32.totalorder %s22, 1
      %p61 = por %p59, %p60
      %p62 = scmp.ne.s32.totalorder %s53, %s54
      %p63 = scmp.eq.s32.totalorder %s22, 0
      %p64 = por %p62, %p63
      %p65 = scmp.ne.s32.totalorder %s53, %s54
      %p66 = scmp.eq.s32.totalorder %s23, 1
      %p67 = por %p65, %p66
      %p69 = scmp.ne.s32.totalorder %s54, %s68
      %p70 = scmp.eq.s32.totalorder %s23, 0
      %p71 = por %p69, %p70
      %s73 = sadd.s32 %s72, 1
      %p76 = scmp.eq.s32.totalorder %s17, 1
      %p77 = scmp.ne.s32.totalorder %s72, %s74
      %p78 = scmp.eq.s32.totalorder %s17, 0
      %p79 = por %p77, %p78
      %p80 = scmp.ne.s32.totalorder %s72, %s74
      %p81 = scmp.eq.s32.totalorder %s22, 1
      %p82 = por %p80, %p81
      %p83 = scmp.ne.s32.totalorder %s74, %s75
      %p84 = scmp.eq.s32.totalorder %s22, 0
      %p85 = por %p83, %p84
      %p86 = scmp.ne.s32.totalorder %s74, %s75
      %p87 = scmp.eq.s32.totalorder %s23, 1
      %p88 = por %p86, %p87
      %p90 = scmp.ne.s32.totalorder %s75, %s89
      %p91 = scmp.eq.s32.totalorder %s23, 0
      %p92 = por %p90, %p91
      %s93 = ssub.s32 %s17, %s24
      %p94 = scmp.eq.s32.totalorder %s93, 0
      %s96 = sadd.s32 %s95, 1
      %s97 = scalar_select %p94, %s95, %s96
      %p100 = pneg %p94
      %p101 = scmp.eq.s32.totalorder %s17, 1
      %p102 = por %p100, %p101
      %p103 = scmp.ne.s32.totalorder %s95, %s98
      %p104 = scmp.eq.s32.totalorder %s17, 0
      %p105 = por %p103, %p104
      %p106 = scmp.ne.s32.totalorder %s95, %s98
      %p107 = scmp.eq.s32.totalorder %s22, 1
      %p108 = por %p106, %p107
      %p109 = scmp.ne.s32.totalorder %s98, %s99
      %p110 = scmp.eq.s32.totalorder %s22, 0
      %p111 = por %p109, %p110
      %p112 = scmp.ne.s32.totalorder %s98, %s99
      %p113 = scmp.eq.s32.totalorder %s23, 1
      %p114 = por %p112, %p113
      %p116 = scmp.ne.s32.totalorder %s99, %s115
      %p117 = scmp.eq.s32.totalorder %s23, 0
      %p118 = por %p116, %p117
      %p119 = scmp.le.s32.totalorder 1, %s17
      %p120 = scmp.lt.s32.totalorder %s17, 3
      %p121 = pnand %p119, %p120
      %p122 = pneg %p121
      // Predicated region
      $region9: #{tpu_custom_call.1} parent=5 // pred_check
        _
      $region10: #{tpu_custom_call.1} parent=5 // pred_check_branch
        %124 = sbr.rel (%p121) target = $region12
      $region11: #{tpu_custom_call.1} parent=5 // pred_region
        %s125 = ssub.s32 %s17, 1
        // Predicated region
        $region13: #{tpu_custom_call.1} parent=11 // pred_check
          %p126 = pneg %p64
        $region14: #{tpu_custom_call.1} parent=11 // pred_check_branch
          %128 = sbr.rel (%p126) target = $region16
        $region15: #{tpu_custom_call.1} parent=11 // pred_region
          %s130 = ssub.s32 64, 64
          %131 = vsyncadd [#allocation7], %s130
          %s133 = sshll.u32 [#allocation6], 4
          %s134 = int_to_ptr.vmem [resolvable:$true] %s133
          %136 = dma.hbm_to_vmem [thread:$0]  %s1, 64, %s134, [#allocation7]
        $region16: #{tpu_custom_call.1} parent=11 // pred_fallthru
          _
        // Predicated region
        $region17: #{tpu_custom_call.1} parent=11 // pred_check
          %p137 = pneg %p85
        $region18: #{tpu_custom_call.1} parent=11 // pred_check_branch
          %139 = sbr.rel (%p137) target = $region20
        $region19: #{tpu_custom_call.1} parent=11 // pred_region
          _
        $region20: #{tpu_custom_call.1} parent=11 // pred_fallthru
          _
      $region12: #{tpu_custom_call.1} parent=5 // pred_fallthru
        _
      %p140 = scmp.lt.s32.totalorder %s17, 2
      // Predicated region
      $region21: #{tpu_custom_call.1} parent=5 // pred_check
        %p141 = pneg %p140
      $region22: #{tpu_custom_call.1} parent=5 // pred_check_branch
        %143 = sbr.rel (%p141) target = $region24
      $region23: #{tpu_custom_call.1} parent=5 // pred_region
        // Predicated region
        $region25: #{tpu_custom_call.1} parent=23 // pred_check
          %p144 = pneg %p37
        $region26: #{tpu_custom_call.1} parent=23 // pred_check_branch
          %146 = sbr.rel (%p144) target = $region28
        $region27: #{tpu_custom_call.1} parent=23 // pred_region
          %s147 = sand.u32 %s27, 1
          %s148 = scalar_lea.sflag [#allocation4], %s147
          %s149 = sand.u32 %s27, 1
          %s150 = smul.addr %s149, 128
          %s151 = scalar_lea.vmem [#allocation3], %s150
          %s152 = smul.u32 16, %s17
          %s154 = ssub.s32 2048, 2048
          %155 = vsyncadd %s148, %s154
          %s156 = smul.addr %s152, 128
          %s157 = scalar_lea.hbm %s0, %s156
          %s158 = sshll.u32 %s151, 4
          %s159 = int_to_ptr.vmem [resolvable:$true] %s158
          %164 = dma.hbm_to_vmem [thread:$0]  %s157, 2048, %s159, %s148, 128, 128, 8
        $region28: #{tpu_custom_call.1} parent=23 // pred_fallthru
          _
      $region24: #{tpu_custom_call.1} parent=5 // pred_fallthru
        _
      %p165 = scmp.le.s32.totalorder 1, %s17
      %p166 = scmp.lt.s32.totalorder %s17, 3
      %p167 = pnand %p165, %p166
      %p168 = pneg %p167
      // Predicated region
      $region29: #{tpu_custom_call.1} parent=5 // pred_check
        _
      $region30: #{tpu_custom_call.1} parent=5 // pred_check_branch
        %170 = sbr.rel (%p167) target = $region32
      $region31: #{tpu_custom_call.1} parent=5 // pred_region
        %s171 = ssub.s32 %s17, 1
        %s172 = sand.u32 %s30, 1
        %s173 = scalar_lea.sflag [#allocation4], %s172
        %s174 = sand.u32 %s30, 1
        %s175 = smul.addr %s174, 128
        %s176 = scalar_lea.vmem [#allocation3], %s175
        // Predicated region
        $region33: #{tpu_custom_call.1} parent=31 // pred_check
          %p177 = pneg %p43
        $region34: #{tpu_custom_call.1} parent=31 // pred_check_branch
          %179 = sbr.rel (%p177) target = $region36
        $region35: #{tpu_custom_call.1} parent=31 // pred_region
          %180 = dma.done %s173, 2048
        $region36: #{tpu_custom_call.1} parent=31 // pred_fallthru
          _
        // Predicated region
        $region37: #{tpu_custom_call.1} parent=31 // pred_check
          %p181 = pneg %p64
        $region38: #{tpu_custom_call.1} parent=31 // pred_check_branch
          %183 = sbr.rel (%p181) target = $region40
        $region39: #{tpu_custom_call.1} parent=31 // pred_region
          %184 = dma.done [#allocation7], 64
        $region40: #{tpu_custom_call.1} parent=31 // pred_fallthru
          _
        %s185 = sand.u32 %s30, 1
        %s186 = scalar_lea.sflag [#allocation4], %s185
        %s187 = sand.u32 %s30, 1
        %s188 = smul.addr %s187, 128
        %s189 = scalar_lea.vmem [#allocation3], %s188
        %p190 = pneg %p43
        %p191 = pneg %p40
        %p192 = pneg %p64
        %p193 = pneg %p61
        %p194 = pneg %p85
        %p195 = pneg %p82
        %p196 = pneg %p111
        %p197 = pneg %p108
        %s198 = sand.u32 %s98, 1
        %s199 = scalar_lea.sflag [#allocation5], %s198
        %s200 = sand.u32 %s98, 1
        %s201 = smul.addr %s200, 4
        %s202 = scalar_lea.vmem [#allocation8], %s201
        %s203 = smul.u32 16, %s22
        %v204 = vld [vmem:[#allocation6] sm:$0xf]
        %s205 = sld [smem:[#allocation2]]
        %v206 = vld [vmem:[%s176] sm:$0xff]
        %v207 = vld [vmem:[%s176 + $0x8] sm:$0xff]
        %v208 = vld [vmem:[%s176 + $0x10] sm:$0xff]
        %v209 = vld [vmem:[%s176 + $0x18] sm:$0xff]
        %v210 = vld [vmem:[%s176 + $0x20] sm:$0xff]
        %v211 = vld [vmem:[%s176 + $0x28] sm:$0xff]
        %v212 = vld [vmem:[%s176 + $0x30] sm:$0xff]
        %v213 = vld [vmem:[%s176 + $0x38] sm:$0xff]
        %v214 = vld [vmem:[%s176 + $0x40] sm:$0xff]
        %v215 = vld [vmem:[%s176 + $0x48] sm:$0xff]
        %v216 = vld [vmem:[%s176 + $0x50] sm:$0xff]
        %v217 = vld [vmem:[%s176 + $0x58] sm:$0xff]
        %v218 = vld [vmem:[%s176 + $0x60] sm:$0xff]
        %v219 = vld [vmem:[%s176 + $0x68] sm:$0xff]
        %v220 = vld [vmem:[%s176 + $0x70] sm:$0xff]
        %v221 = vld [vmem:[%s176 + $0x78] sm:$0xff]
        %v222 = vstv %s205
        %223 = vmatprep.subr.mxu0 0.0
        %224 = vmatpush1.xpose.msra.mxu0 %v221
        %225 = vmatprep.subr.mxu0 0.0
        %226 = vmatpush1.xpose.msra.mxu0 %v220
        %227 = vmatprep.subr.mxu0 0.0
        %228 = vmatpush1.xpose.msra.mxu0 %v219
        %229 = vmatprep.subr.mxu0 0.0
        %230 = vmatpush1.xpose.msra.mxu0 %v218
        %231 = vmatprep.subr.mxu0 0.0
        %232 = vmatpush1.xpose.msra.mxu0 %v217
        %233 = vmatprep.subr.mxu0 0.0
        %234 = vmatpush1.xpose.msra.mxu0 %v216
        %235 = vmatprep.subr.mxu0 0.0
        %236 = vmatpush1.xpose.msra.mxu0 %v215
        %237 = vmatprep.subr.mxu0 0.0
        %238 = vmatpush1.xpose.msra.mxu0 %v214
        %239 = vmatprep.subr.mxu0 0.0
        %240 = vmatpush1.xpose.msra.mxu0 %v213
        %241 = vmatprep.subr.mxu0 0.0
        %242 = vmatpush1.xpose.msra.mxu0 %v212
        %243 = vmatprep.subr.mxu0 0.0
        %244 = vmatpush1.xpose.msra.mxu0 %v211
        %245 = vmatprep.subr.mxu0 0.0
        %246 = vmatpush1.xpose.msra.mxu0 %v210
        %247 = vmatprep.subr.mxu0 0.0
        %248 = vmatpush1.xpose.msra.mxu0 %v209
        %249 = vmatprep.subr.mxu0 0.0
        %250 = vmatpush1.xpose.msra.mxu0 %v208
        %251 = vmatprep.subr.mxu0 0.0
        %252 = vmatpush1.xpose.msra.mxu0 %v207
        %253 = vmatprep.subr.mxu0 0.0
        %254 = vmatpush1.xpose.msra.mxu0 %v206
        %255 = vmatprep.subr.mxu0 0.0
        %256 = vmatpush2.xpose.msra.mxu0 0.0
        %257 = vmatprep.subr.mxu0 0.0
        %258 = vmatpush2.xpose.msra.mxu0 0.0
        %259 = vmatprep.subr.mxu0 0.0
        %260 = vmatpush2.xpose.msra.mxu0 0.0
        %261 = vmatprep.subr.mxu0 0.0
        %262 = vmatpush2.xpose.msra.mxu0 0.0
        %263 = vmatprep.subr.mxu0 0.0
        %264 = vmatpush2.xpose.msra.mxu0 0.0
        %265 = vmatprep.subr.mxu0 0.0
        %266 = vmatpush2.xpose.msra.mxu0 0.0
        %267 = vmatprep.subr.mxu0 0.0
        %268 = vmatpush2.xpose.msra.mxu0 0.0
        %269 = vmatprep.subr.mxu0 0.0
        %270 = vmatpush2.xpose.msra.mxu0 0.0
        %271 = vmatprep.subr.mxu0 0.0
        %272 = vmatpush2.xpose.msra.mxu0 0.0
        %273 = vmatprep.subr.mxu0 0.0
        %274 = vmatpush2.xpose.msra.mxu0 0.0
        %275 = vmatprep.subr.mxu0 0.0
        %276 = vmatpush2.xpose.msra.mxu0 0.0
        %277 = vmatprep.subr.mxu0 0.0
        %278 = vmatpush2.xpose.msra.mxu0 0.0
        %279 = vmatprep.subr.mxu0 0.0
        %280 = vmatpush2.xpose.msra.mxu0 0.0
        %281 = vmatprep.subr.mxu0 0.0
        %282 = vmatpush2.xpose.msra.mxu0 0.0
        %283 = vmatprep.subr.mxu0 0.0
        %284 = vmatpush2.xpose.msra.mxu0 0.0
        %285 = vmatprep.subr.mxu0 0.0
        %286 = vmatpush2.xpose.msra.mxu0 0.0
        %287 = vmatprep.mubr.f32.mxu0 0.0
        %288 = vmatmul.mubr.f32.gmra.mxu0 %v204
        %v289 = vpop.f32.mrf.mxu0
        %v290 = vadd.f32 %v222, %v289
        %v291 = vpop.f32.mrf.mxu0
        %292 = vdwg.mxu0
        %293 = vst [vmem:[%s202] sm:$0xf] %v290
        %s294 = sand.u32 %s98, 1
        %s295 = scalar_lea.sflag [#allocation5], %s294
        %s296 = sand.u32 %s98, 1
        %s297 = smul.addr %s296, 4
        %s298 = scalar_lea.vmem [#allocation8], %s297
        // Predicated region
        $region41: #{tpu_custom_call.1} parent=31 // pred_check
          %p299 = pneg %p108
        $region42: #{tpu_custom_call.1} parent=31 // pred_check_branch
          %301 = sbr.rel (%p299) target = $region44
        $region43: #{tpu_custom_call.1} parent=31 // pred_region
          %s303 = ssub.s32 64, 64
          %304 = vsyncadd %s295, %s303
          %s305 = smul.addr %s22, 64
          %s306 = scalar_lea.hbm %s3, %s305
          %s308 = sshll.u32 %s298, 4
          %s309 = int_to_ptr.vmem [resolvable:$true] %s308
          %311 = dma.vmem_to_hbm [thread:$0]  %s309, 64, %s306, %s295
        $region44: #{tpu_custom_call.1} parent=31 // pred_fallthru
          _
      $region32: #{tpu_custom_call.1} parent=5 // pred_fallthru
        _
      %p312 = scmp.le.s32.totalorder 2, %s17
      // Predicated region
      $region45: #{tpu_custom_call.1} parent=5 // pred_check
        %p313 = pneg %p312
      $region46: #{tpu_custom_call.1} parent=5 // pred_check_branch
        %315 = sbr.rel (%p313) target = $region48
      $region47: #{tpu_custom_call.1} parent=5 // pred_region
        %s316 = ssub.s32 %s17, 2
        // Predicated region
        $region49: #{tpu_custom_call.1} parent=47 // pred_check
          %p317 = pneg %p114
        $region50: #{tpu_custom_call.1} parent=47 // pred_check_branch
          %319 = sbr.rel (%p317) target = $region52
        $region51: #{tpu_custom_call.1} parent=47 // pred_region
          %s320 = sand.u32 %s99, 1
          %s321 = scalar_lea.sflag [#allocation5], %s320
          %s322 = sand.u32 %s99, 1
          %s323 = smul.addr %s322, 4
          %s324 = scalar_lea.vmem [#allocation8], %s323
          %325 = dma.done %s321, 64
        $region52: #{tpu_custom_call.1} parent=47 // pred_fallthru
          _
      $region48: #{tpu_custom_call.1} parent=5 // pred_fallthru
        _
    $region6: #{tpu_custom_call.1} parent=1 // loop_footer
      %s21 = sadd.s32 1, %s17
    $region7: #{tpu_custom_call.1} parent=1 // loop_footer_branch
      %16 = sbr.rel target = $region3
    $region8: #{tpu_custom_call.1} parent=1 // loop_exit
      _
    %326 = vsyncpa [#allocation4], 1
    %s327 = scalar_lea.sflag [#allocation4], 1
    %328 = vsyncpa %s327, 1
    %329 = vsyncpa [#allocation7], 1
    %330 = vsyncpa [#allocation5], 1
    %s331 = scalar_lea.sflag [#allocation5], 1
    %332 = vsyncpa %s331, 1

</llo_original>
